<compile_context>
chip_gen: v6e
topology: v6e:2x2x1
jax: 0.10.0
libtpu: 0.0.40
codegen_flags: <defaults>
</compile_context>

<pallas_src>
import functools
import math

import jax
import jax.numpy as jnp
from jax.experimental import pallas as pl
from jax.experimental.pallas import tpu as pltpu

BN_EPS = 1e-5


# --------------------------------- kernel ---------------------------------- #
def _encoder_kernel(x_ref, w1_ref, w2_ref, p_ref, out_ref,
                    col1_ref, col2_ref, *, H, W):
    N = x_ref.shape[0]
    HW = H * W
    M = N * HW
    c1 = w1_ref.shape[0]            # 6
    c2 = w2_ref.shape[0]            # 16

    # (Cin, N*H*W): channels on sublanes, flattened spatial on lanes.
    # Lane offsets are multiples of HW=256 -> aligned concat.
    x = jnp.concatenate([x_ref[n] for n in range(N)], axis=1)

    # Per-column (h, w) position on the full HxW grid.  Float arithmetic is
    # exact here (integers < 2^23) and avoids integer div/mod on the VPU.
    col = jax.lax.broadcasted_iota(jnp.int32, (1, M), 1).astype(jnp.float32)
    row = jnp.floor(col / W)                     # n*H + h
    wpos = col - row * W                         # w
    hpos = row - jnp.floor(row / H) * H          # h

    def valid_mask(ho, wo):                      # 1.0 on the valid ho x wo region
        return jnp.where((hpos < ho) & (wpos < wo), 1.0, 0.0)

    def build_im2col(inp, col_ref):
        # inp: (Cin, M) f32 on the full grid.  Tap (kh, kw) needs
        # tapped[:, m] = inp[:, (m + kh*W + kw) % M], i.e. a left-roll by d,
        # which is pltpu.roll with shift = M - d (np.roll convention).
        cin = inp.shape[0]
        for kh in range(3):
            for kw in range(3):
                d = kh * W + kw
                t = kh * 3 + kw
                rolled = inp if d == 0 else pltpu.roll(inp, shift=M - d, axis=1)
                col_ref[t * cin:(t + 1) * cin, :] = rolled
        return col_ref[...]

    def conv3x3(inp, col_ref, wf_ref, b_col):
        # One fused MXU matmul: (Cout, 9*Cin) @ (9*Cin, M), explicit bf16
        # operands, f32 accumulation.
        colm = build_im2col(inp, col_ref).astype(jnp.bfloat16)
        return jnp.dot(wf_ref[...], colm,
                       preferred_element_type=jnp.float32) + b_col

    def bn_relu(y, mask, count, g_col, b_col):
        # Training-mode batch stats (biased variance) over the masked valid
        # region; mean-shifted variance to avoid E[x^2]-E[x]^2 cancellation.
        inv = 1.0 / count
        mean = jnp.sum(y * mask, axis=1, keepdims=True) * inv
        dev = (y - mean) * mask
        var = jnp.sum(dev * dev, axis=1, keepdims=True) * inv
        scale = g_col * jax.lax.rsqrt(var + BN_EPS)      # rsqrt -> EUP slot
        shift = b_col - mean * scale
        return jnp.maximum(y * scale + shift, 0.0)

    y1 = conv3x3(x, col1_ref, w1_ref, p_ref[0:c1, 0:1])                # (6, M)
    y1 = bn_relu(y1, valid_mask(H - 2, W - 2), float(N * (H - 2) * (W - 2)),
                 p_ref[0:c1, 1:2], p_ref[0:c1, 2:3])
    y2 = conv3x3(y1, col2_ref, w2_ref, p_ref[0:c2, 3:4])               # (16, M)
    y2 = bn_relu(y2, valid_mask(H - 4, W - 4), float(N * (H - 4) * (W - 4)),
                 p_ref[0:c2, 4:5], p_ref[0:c2, 5:6])

    # Single unmasked, fully lane-dense store: (16, N*H*W).
    out_ref[...] = y2


# -------------------------------- wrapper ----------------------------------- #
def _fuse_w(w_oihw):
    """(Cout, Cin, 3, 3) PyTorch layout -> (Cout, 9*Cin) bf16 im2col weight."""
    cout, cin = w_oihw.shape[0], w_oihw.shape[1]
    return (jnp.transpose(w_oihw, (0, 2, 3, 1))       # (Cout, KH, KW, Cin)
            .reshape(cout, 9 * cin)
            .astype(jnp.bfloat16))


@jax.jit
def encoder_forward(x_nchw, params):
    """x_nchw: (N, 3, H, W) -> (N, 16, H-4, W-4), PyTorch Encoder semantics."""
    N, Cin, H, W = x_nchw.shape
    c2 = params["w2"].shape[0]
    M = N * H * W
    x = x_nchw.reshape(N, Cin, H * W).astype(jnp.float32)   # free: no transpose
    w1f = _fuse_w(params["w1"])                              # (6, 27)  bf16
    w2f = _fuse_w(params["w2"])                              # (16, 54) bf16

    vmem = pl.BlockSpec(memory_space=pltpu.MemorySpace.VMEM)
    out_flat = pl.pallas_call(
        functools.partial(_encoder_kernel, H=H, W=W),
        out_shape=jax.ShapeDtypeStruct((c2, M), jnp.float32),
        in_specs=[vmem] * 4,
        out_specs=vmem,
        scratch_shapes=[pltpu.VMEM((9 * Cin, M), jnp.float32),   # im2col conv1
                        pltpu.VMEM((9 * 6, M), jnp.float32)],    # im2col conv2
    )(x, w1f, w2f, params["p"])

    # (16, N*H*W) -> NCHW, keeping only the valid (H-4)x(W-4) region.
    out = out_flat.reshape(c2, N, H, W).transpose(1, 0, 2, 3)
    return out[:, :, :H - 4, :W - 4]


# ------------------------- deterministic parameters ------------------------- #
def init_params(key):
    k1, k2, k3, k4 = jax.random.split(key, 4)

    def conv_init(kw_key, kb_key, cin, cout):
        bound = 1.0 / math.sqrt(cin * 9)
        # PyTorch Conv2d layout (Cout, Cin, KH, KW).  Weights are rounded to be
        # exactly bf16-representable so the bf16-operand MXU matmul and the f32
        # reference see identical weights (isolates kernel correctness).
        w = jax.random.uniform(kw_key, (cout, cin, 3, 3), jnp.float32,
                               minval=-bound, maxval=bound)
        w = w.astype(jnp.bfloat16).astype(jnp.float32)
        b = jax.random.uniform(kb_key, (cout,), jnp.float32,
                               minval=-bound, maxval=bound)
        return w, b

    w1, b1 = conv_init(k1, k2, 3, 6)
    w2, b2 = conv_init(k3, k4, 6, 16)

    # packed per-channel params: columns = [b1, g1, be1, b2, g2, be2]
    p = jnp.zeros((16, 6), jnp.float32)
    p = p.at[0:6, 0].set(b1)       # conv1 bias
    p = p.at[0:6, 1].set(1.0)      # bn1 gamma   (bn1 beta stays 0)
    p = p.at[0:16, 3].set(b2)      # conv2 bias
    p = p.at[0:16, 4].set(1.0)     # bn2 gamma   (bn2 beta stays 0)
    return dict(w1=w1, w2=w2, p=p)


# --------------------------- pure-JAX reference ----------------------------- #
def encoder_reference(x_nchw, params):
    x = jnp.transpose(x_nchw, (0, 2, 3, 1)).astype(jnp.float32)   # NHWC
    dn = ("NHWC", "HWIO", "NHWC")
    p = params["p"]

    def block(x, w_oihw, b, g, be):
        w = jnp.transpose(w_oihw, (2, 3, 1, 0))                   # HWIO
        y = jax.lax.conv_general_dilated(
            x, w, (1, 1), "VALID", dimension_numbers=dn,
            precision=jax.lax.Precision.HIGHEST) + b
        mean = jnp.mean(y, axis=(0, 1, 2), keepdims=True)
        var = jnp.mean((y - mean) ** 2, axis=(0, 1, 2), keepdims=True)
        y = (y - mean) * jax.lax.rsqrt(var + BN_EPS) * g + be
        return jnp.maximum(y, 0.0)

    y = block(x, params["w1"], p[0:6, 0], p[0:6, 1], p[0:6, 2])
    y = block(y, params["w2"], p[0:16, 3], p[0:16, 4], p[0:16, 5])
    return jnp.transpose(y, (0, 3, 1, 2))


# ----------------------------------- main ----------------------------------- #
if __name__ == "__main__":
    key = jax.random.PRNGKey(0)
    kx, kp = jax.random.split(key)
    # bf16-representable test input (matches what the MXU consumes exactly).
    x = jax.random.normal(kx, (2, 3, 16, 16), jnp.float32)
    x = x.astype(jnp.bfloat16).astype(jnp.float32)
    params = init_params(kp)

    out = jax.block_until_ready(encoder_forward(x, params))
    assert out.shape == (2, 16, 12, 12), out.shape

    ref = jax.block_until_ready(encoder_reference(x, params))
    err = float(jnp.max(jnp.abs(out - ref)))
    # Remaining mismatch vs. the HIGHEST-precision f32 reference comes from the
    # explicit bf16 cast of the (unit-scale, post-BN) layer-1 activations
    # feeding conv2's MXU matmul; tolerance covers that with margin while any
    # indexing/layout bug would produce O(1) errors on the normalized outputs.
    assert jnp.allclose(out, ref, atol=2e-2, rtol=2e-2), err

    print("KERNEL_OK")
</pallas_src>

<mosaic_0001>
module attributes {stable_mosaic.version = 11 : i64} {
  func.func @_encoder_kernel(%arg0: memref<2x3x256xf32, #tpu.memory_space<vmem>>, %arg1: memref<6x27xbf16, #tpu.memory_space<vmem>>, %arg2: memref<16x54xbf16, #tpu.memory_space<vmem>>, %arg3: memref<16x6xf32, #tpu.memory_space<vmem>>, %arg4: memref<16x512xf32, #tpu.memory_space<vmem>>, %arg5: memref<27x512xf32, #tpu.memory_space<vmem>>, %arg6: memref<54x512xf32, #tpu.memory_space<vmem>>) attributes {dimension_semantics = [], scalar_prefetch = 0 : i64, scratch_operands = 2 : i64, tpu.core_type = #tpu.core_type<tc>} {
    %c0 = arith.constant 0 : index
    %c0_0 = arith.constant 0 : index
    %c0_1 = arith.constant 0 : index
    %0 = vector.load %arg0[%c0, %c0_0, %c0_1] : memref<2x3x256xf32, #tpu.memory_space<vmem>>, vector<1x3x256xf32>
    %1 = vector.shape_cast %0 : vector<1x3x256xf32> to vector<3x256xf32>
    %c1 = arith.constant 1 : index
    %c0_2 = arith.constant 0 : index
    %c0_3 = arith.constant 0 : index
    %2 = vector.load %arg0[%c1, %c0_2, %c0_3] : memref<2x3x256xf32, #tpu.memory_space<vmem>>, vector<1x3x256xf32>
    %3 = vector.shape_cast %2 : vector<1x3x256xf32> to vector<3x256xf32>
    %4 = tpu.concatenate %1, %3 in 1 : vector<3x256xf32>, vector<3x256xf32> -> vector<3x512xf32>
    %5 = tpu.iota {dimensions = array<i32: 1>} : vector<1x512xi32>
    %6 = arith.sitofp %5 : vector<1x512xi32> to vector<1x512xf32>
    %cst = arith.constant 1.600000e+01 : f32
    %7 = vector.broadcast %cst : f32 to vector<1x512xf32>
    %8 = arith.divf %6, %7 : vector<1x512xf32>
    %9 = math.floor %8 : vector<1x512xf32>
    %cst_4 = arith.constant 1.600000e+01 : f32
    %10 = vector.broadcast %cst_4 : f32 to vector<1x512xf32>
    %11 = arith.mulf %9, %10 : vector<1x512xf32>
    %12 = arith.subf %6, %11 : vector<1x512xf32>
    %cst_5 = arith.constant 1.600000e+01 : f32
    %13 = vector.broadcast %cst_5 : f32 to vector<1x512xf32>
    %14 = arith.divf %9, %13 : vector<1x512xf32>
    %15 = math.floor %14 : vector<1x512xf32>
    %cst_6 = arith.constant 1.600000e+01 : f32
    %16 = vector.broadcast %cst_6 : f32 to vector<1x512xf32>
    %17 = arith.mulf %15, %16 : vector<1x512xf32>
    %18 = arith.subf %9, %17 : vector<1x512xf32>
    %c0_7 = arith.constant 0 : index
    %c0_8 = arith.constant 0 : index
    %19 = vector.load %arg3[%c0_7, %c0_8] : memref<16x6xf32, #tpu.memory_space<vmem>>, vector<6x1xf32>
    %c0_9 = arith.constant 0 : index
    %c0_10 = arith.constant 0 : index
    %20 = vector.load %arg5[%c0_9, %c0_10] : memref<27x512xf32, #tpu.memory_space<vmem>>, vector<3x512xf32>
    tpu.vector_store %arg5[%c0_9, %c0_10], %4 {strides = array<i32>} : memref<27x512xf32, #tpu.memory_space<vmem>>, vector<3x512xf32>,
    %c511_i32 = arith.constant 511 : i32
    %21 = tpu.dynamic_rotate %4 by %c511_i32 dim 1 : vector<3x512xf32>, i32 -> vector<3x512xf32>
    %c3 = arith.constant 3 : index
    %c0_11 = arith.constant 0 : index
    %22 = vector.load %arg5[%c3, %c0_11] : memref<27x512xf32, #tpu.memory_space<vmem>>, vector<3x512xf32>
    tpu.vector_store %arg5[%c3, %c0_11], %21 {strides = array<i32>} : memref<27x512xf32, #tpu.memory_space<vmem>>, vector<3x512xf32>,
    %c510_i32 = arith.constant 510 : i32
    %23 = tpu.dynamic_rotate %4 by %c510_i32 dim 1 : vector<3x512xf32>, i32 -> vector<3x512xf32>
    %c6 = arith.constant 6 : index
    %c0_12 = arith.constant 0 : index
    %24 = vector.load %arg5[%c6, %c0_12] : memref<27x512xf32, #tpu.memory_space<vmem>>, vector<3x512xf32>
    tpu.vector_store %arg5[%c6, %c0_12], %23 {strides = array<i32>} : memref<27x512xf32, #tpu.memory_space<vmem>>, vector<3x512xf32>,
    %c496_i32 = arith.constant 496 : i32
    %25 = tpu.dynamic_rotate %4 by %c496_i32 dim 1 : vector<3x512xf32>, i32 -> vector<3x512xf32>
    %c9 = arith.constant 9 : index
    %c0_13 = arith.constant 0 : index
    %26 = vector.load %arg5[%c9, %c0_13] : memref<27x512xf32, #tpu.memory_space<vmem>>, vector<3x512xf32>
    tpu.vector_store %arg5[%c9, %c0_13], %25 {strides = array<i32>} : memref<27x512xf32, #tpu.memory_space<vmem>>, vector<3x512xf32>,
    %c495_i32 = arith.constant 495 : i32
    %27 = tpu.dynamic_rotate %4 by %c495_i32 dim 1 : vector<3x512xf32>, i32 -> vector<3x512xf32>
    %c12 = arith.constant 12 : index
    %c0_14 = arith.constant 0 : index
    %28 = vector.load %arg5[%c12, %c0_14] : memref<27x512xf32, #tpu.memory_space<vmem>>, vector<3x512xf32>
    tpu.vector_store %arg5[%c12, %c0_14], %27 {strides = array<i32>} : memref<27x512xf32, #tpu.memory_space<vmem>>, vector<3x512xf32>,
    %c494_i32 = arith.constant 494 : i32
    %29 = tpu.dynamic_rotate %4 by %c494_i32 dim 1 : vector<3x512xf32>, i32 -> vector<3x512xf32>
    %c15 = arith.constant 15 : index
    %c0_15 = arith.constant 0 : index
    %30 = vector.load %arg5[%c15, %c0_15] : memref<27x512xf32, #tpu.memory_space<vmem>>, vector<3x512xf32>
    tpu.vector_store %arg5[%c15, %c0_15], %29 {strides = array<i32>} : memref<27x512xf32, #tpu.memory_space<vmem>>, vector<3x512xf32>,
    %c480_i32 = arith.constant 480 : i32
    %31 = tpu.dynamic_rotate %4 by %c480_i32 dim 1 : vector<3x512xf32>, i32 -> vector<3x512xf32>
    %c18 = arith.constant 18 : index
    %c0_16 = arith.constant 0 : index
    %32 = vector.load %arg5[%c18, %c0_16] : memref<27x512xf32, #tpu.memory_space<vmem>>, vector<3x512xf32>
    tpu.vector_store %arg5[%c18, %c0_16], %31 {strides = array<i32>} : memref<27x512xf32, #tpu.memory_space<vmem>>, vector<3x512xf32>,
    %c479_i32 = arith.constant 479 : i32
    %33 = tpu.dynamic_rotate %4 by %c479_i32 dim 1 : vector<3x512xf32>, i32 -> vector<3x512xf32>
    %c21 = arith.constant 21 : index
    %c0_17 = arith.constant 0 : index
    %34 = vector.load %arg5[%c21, %c0_17] : memref<27x512xf32, #tpu.memory_space<vmem>>, vector<3x512xf32>
    tpu.vector_store %arg5[%c21, %c0_17], %33 {strides = array<i32>} : memref<27x512xf32, #tpu.memory_space<vmem>>, vector<3x512xf32>,
    %c478_i32 = arith.constant 478 : i32
    %35 = tpu.dynamic_rotate %4 by %c478_i32 dim 1 : vector<3x512xf32>, i32 -> vector<3x512xf32>
    %c24 = arith.constant 24 : index
    %c0_18 = arith.constant 0 : index
    %36 = vector.load %arg5[%c24, %c0_18] : memref<27x512xf32, #tpu.memory_space<vmem>>, vector<3x512xf32>
    tpu.vector_store %arg5[%c24, %c0_18], %35 {strides = array<i32>} : memref<27x512xf32, #tpu.memory_space<vmem>>, vector<3x512xf32>,
    %c0_19 = arith.constant 0 : index
    %c0_20 = arith.constant 0 : index
    %37 = vector.load %arg5[%c0_19, %c0_20] : memref<27x512xf32, #tpu.memory_space<vmem>>, vector<27x512xf32>
    %38 = arith.truncf %37 : vector<27x512xf32> to vector<27x512xbf16>
    %c0_21 = arith.constant 0 : index
    %c0_22 = arith.constant 0 : index
    %39 = vector.load %arg1[%c0_21, %c0_22] : memref<6x27xbf16, #tpu.memory_space<vmem>>, vector<6x27xbf16>
    %cst_23 = arith.constant dense<0.000000e+00> : vector<6x512xf32>
    %40 = tpu.matmul %39, %38, %cst_23 {dimension_numbers = #tpu.dot_dimension_numbers<[1], [0], [0], [1], [0, 0, 1, 1], [], []>} : vector<6x27xbf16>, vector<27x512xbf16>, vector<6x512xf32> -> vector<6x512xf32>
    %41 = vector.broadcast %19 : vector<6x1xf32> to vector<6x512xf32>
    %42 = arith.addf %40, %41 : vector<6x512xf32>
    %cst_24 = arith.constant 1.400000e+01 : f32
    %43 = vector.broadcast %cst_24 : f32 to vector<1x512xf32>
    %44 = arith.cmpf olt, %18, %43 : vector<1x512xf32>
    %cst_25 = arith.constant 1.400000e+01 : f32
    %45 = vector.broadcast %cst_25 : f32 to vector<1x512xf32>
    %46 = arith.cmpf olt, %12, %45 : vector<1x512xf32>
    %47 = arith.andi %44, %46 : vector<1x512xi1>
    %cst_26 = arith.constant 1.000000e+00 : f32
    %cst_27 = arith.constant 0.000000e+00 : f32
    %48 = vector.broadcast %cst_26 : f32 to vector<1x512xf32>
    %49 = vector.broadcast %cst_27 : f32 to vector<1x512xf32>
    %50 = arith.select %47, %48, %49 : vector<1x512xi1>, vector<1x512xf32>
    %c0_28 = arith.constant 0 : index
    %c1_29 = arith.constant 1 : index
    %51 = vector.load %arg3[%c0_28, %c1_29] : memref<16x6xf32, #tpu.memory_space<vmem>>, vector<6x1xf32>
    %c0_30 = arith.constant 0 : index
    %c2 = arith.constant 2 : index
    %52 = vector.load %arg3[%c0_30, %c2] : memref<16x6xf32, #tpu.memory_space<vmem>>, vector<6x1xf32>
    %53 = vector.broadcast %50 : vector<1x512xf32> to vector<6x512xf32>
    %54 = arith.mulf %42, %53 : vector<6x512xf32>
    %cst_31 = arith.constant dense<0.000000e+00> : vector<6xf32>
    %55 = vector.multi_reduction <add>, %54, %cst_31 [1] : vector<6x512xf32> to vector<6xf32>
    %56 = vector.shape_cast %55 : vector<6xf32> to vector<6x1xf32>
    %cst_32 = arith.constant 0.00255102036 : f32
    %57 = vector.broadcast %cst_32 : f32 to vector<6x1xf32>
    %58 = arith.mulf %56, %57 : vector<6x1xf32>
    %59 = vector.broadcast %58 : vector<6x1xf32> to vector<6x512xf32>
    %60 = arith.subf %42, %59 : vector<6x512xf32>
    %61 = vector.broadcast %50 : vector<1x512xf32> to vector<6x512xf32>
    %62 = arith.mulf %60, %61 : vector<6x512xf32>
    %63 = arith.mulf %62, %62 : vector<6x512xf32>
    %cst_33 = arith.constant dense<0.000000e+00> : vector<6xf32>
    %64 = vector.multi_reduction <add>, %63, %cst_33 [1] : vector<6x512xf32> to vector<6xf32>
    %65 = vector.shape_cast %64 : vector<6xf32> to vector<6x1xf32>
    %cst_34 = arith.constant 0.00255102036 : f32
    %66 = vector.broadcast %cst_34 : f32 to vector<6x1xf32>
    %67 = arith.mulf %65, %66 : vector<6x1xf32>
    %cst_35 = arith.constant 9.99999974E-6 : f32
    %68 = vector.broadcast %cst_35 : f32 to vector<6x1xf32>
    %69 = arith.addf %67, %68 : vector<6x1xf32>
    %70 = math.rsqrt %69 : vector<6x1xf32>
    %71 = arith.mulf %51, %70 : vector<6x1xf32>
    %72 = arith.mulf %58, %71 : vector<6x1xf32>
    %73 = arith.subf %52, %72 : vector<6x1xf32>
    %74 = vector.broadcast %71 : vector<6x1xf32> to vector<6x512xf32>
    %75 = arith.mulf %42, %74 : vector<6x512xf32>
    %76 = vector.broadcast %73 : vector<6x1xf32> to vector<6x512xf32>
    %77 = arith.addf %75, %76 : vector<6x512xf32>
    %cst_36 = arith.constant 0.000000e+00 : f32
    %78 = vector.broadcast %cst_36 : f32 to vector<6x512xf32>
    %79 = arith.maximumf %77, %78 : vector<6x512xf32>
    %c0_37 = arith.constant 0 : index
    %c3_38 = arith.constant 3 : index
    %80 = vector.load %arg3[%c0_37, %c3_38] : memref<16x6xf32, #tpu.memory_space<vmem>>, vector<16x1xf32>
    %c0_39 = arith.constant 0 : index
    %c0_40 = arith.constant 0 : index
    %81 = vector.load %arg6[%c0_39, %c0_40] : memref<54x512xf32, #tpu.memory_space<vmem>>, vector<6x512xf32>
    tpu.vector_store %arg6[%c0_39, %c0_40], %79 {strides = array<i32>} : memref<54x512xf32, #tpu.memory_space<vmem>>, vector<6x512xf32>,
    %c511_i32_41 = arith.constant 511 : i32
    %82 = tpu.dynamic_rotate %79 by %c511_i32_41 dim 1 : vector<6x512xf32>, i32 -> vector<6x512xf32>
    %c6_42 = arith.constant 6 : index
    %c0_43 = arith.constant 0 : index
    %83 = vector.load %arg6[%c6_42, %c0_43] : memref<54x512xf32, #tpu.memory_space<vmem>>, vector<6x512xf32>
    tpu.vector_store %arg6[%c6_42, %c0_43], %82 {strides = array<i32>} : memref<54x512xf32, #tpu.memory_space<vmem>>, vector<6x512xf32>,
    %c510_i32_44 = arith.constant 510 : i32
    %84 = tpu.dynamic_rotate %79 by %c510_i32_44 dim 1 : vector<6x512xf32>, i32 -> vector<6x512xf32>
    %c12_45 = arith.constant 12 : index
    %c0_46 = arith.constant 0 : index
    %85 = vector.load %arg6[%c12_45, %c0_46] : memref<54x512xf32, #tpu.memory_space<vmem>>, vector<6x512xf32>
    tpu.vector_store %arg6[%c12_45, %c0_46], %84 {strides = array<i32>} : memref<54x512xf32, #tpu.memory_space<vmem>>, vector<6x512xf32>,
    %c496_i32_47 = arith.constant 496 : i32
    %86 = tpu.dynamic_rotate %79 by %c496_i32_47 dim 1 : vector<6x512xf32>, i32 -> vector<6x512xf32>
    %c18_48 = arith.constant 18 : index
    %c0_49 = arith.constant 0 : index
    %87 = vector.load %arg6[%c18_48, %c0_49] : memref<54x512xf32, #tpu.memory_space<vmem>>, vector<6x512xf32>
    tpu.vector_store %arg6[%c18_48, %c0_49], %86 {strides = array<i32>} : memref<54x512xf32, #tpu.memory_space<vmem>>, vector<6x512xf32>,
    %c495_i32_50 = arith.constant 495 : i32
    %88 = tpu.dynamic_rotate %79 by %c495_i32_50 dim 1 : vector<6x512xf32>, i32 -> vector<6x512xf32>
    %c24_51 = arith.constant 24 : index
    %c0_52 = arith.constant 0 : index
    %89 = vector.load %arg6[%c24_51, %c0_52] : memref<54x512xf32, #tpu.memory_space<vmem>>, vector<6x512xf32>
    tpu.vector_store %arg6[%c24_51, %c0_52], %88 {strides = array<i32>} : memref<54x512xf32, #tpu.memory_space<vmem>>, vector<6x512xf32>,
    %c494_i32_53 = arith.constant 494 : i32
    %90 = tpu.dynamic_rotate %79 by %c494_i32_53 dim 1 : vector<6x512xf32>, i32 -> vector<6x512xf32>
    %c30 = arith.constant 30 : index
    %c0_54 = arith.constant 0 : index
    %91 = vector.load %arg6[%c30, %c0_54] : memref<54x512xf32, #tpu.memory_space<vmem>>, vector<6x512xf32>
    tpu.vector_store %arg6[%c30, %c0_54], %90 {strides = array<i32>} : memref<54x512xf32, #tpu.memory_space<vmem>>, vector<6x512xf32>,
    %c480_i32_55 = arith.constant 480 : i32
    %92 = tpu.dynamic_rotate %79 by %c480_i32_55 dim 1 : vector<6x512xf32>, i32 -> vector<6x512xf32>
    %c36 = arith.constant 36 : index
    %c0_56 = arith.constant 0 : index
    %93 = vector.load %arg6[%c36, %c0_56] : memref<54x512xf32, #tpu.memory_space<vmem>>, vector<6x512xf32>
    tpu.vector_store %arg6[%c36, %c0_56], %92 {strides = array<i32>} : memref<54x512xf32, #tpu.memory_space<vmem>>, vector<6x512xf32>,
    %c479_i32_57 = arith.constant 479 : i32
    %94 = tpu.dynamic_rotate %79 by %c479_i32_57 dim 1 : vector<6x512xf32>, i32 -> vector<6x512xf32>
    %c42 = arith.constant 42 : index
    %c0_58 = arith.constant 0 : index
    %95 = vector.load %arg6[%c42, %c0_58] : memref<54x512xf32, #tpu.memory_space<vmem>>, vector<6x512xf32>
    tpu.vector_store %arg6[%c42, %c0_58], %94 {strides = array<i32>} : memref<54x512xf32, #tpu.memory_space<vmem>>, vector<6x512xf32>,
    %c478_i32_59 = arith.constant 478 : i32
    %96 = tpu.dynamic_rotate %79 by %c478_i32_59 dim 1 : vector<6x512xf32>, i32 -> vector<6x512xf32>
    %c48 = arith.constant 48 : index
    %c0_60 = arith.constant 0 : index
    %97 = vector.load %arg6[%c48, %c0_60] : memref<54x512xf32, #tpu.memory_space<vmem>>, vector<6x512xf32>
    tpu.vector_store %arg6[%c48, %c0_60], %96 {strides = array<i32>} : memref<54x512xf32, #tpu.memory_space<vmem>>, vector<6x512xf32>,
    %c0_61 = arith.constant 0 : index
    %c0_62 = arith.constant 0 : index
    %98 = vector.load %arg6[%c0_61, %c0_62] : memref<54x512xf32, #tpu.memory_space<vmem>>, vector<54x512xf32>
    %99 = arith.truncf %98 : vector<54x512xf32> to vector<54x512xbf16>
    %c0_63 = arith.constant 0 : index
    %c0_64 = arith.constant 0 : index
    %100 = vector.load %arg2[%c0_63, %c0_64] : memref<16x54xbf16, #tpu.memory_space<vmem>>, vector<16x54xbf16>
    %cst_65 = arith.constant dense<0.000000e+00> : vector<16x512xf32>
    %101 = tpu.matmul %100, %99, %cst_65 {dimension_numbers = #tpu.dot_dimension_numbers<[1], [0], [0], [1], [0, 0, 1, 1], [], []>} : vector<16x54xbf16>, vector<54x512xbf16>, vector<16x512xf32> -> vector<16x512xf32>
    %102 = vector.broadcast %80 : vector<16x1xf32> to vector<16x512xf32>
    %103 = arith.addf %101, %102 : vector<16x512xf32>
    %cst_66 = arith.constant 1.200000e+01 : f32
    %104 = vector.broadcast %cst_66 : f32 to vector<1x512xf32>
    %105 = arith.cmpf olt, %18, %104 : vector<1x512xf32>
    %cst_67 = arith.constant 1.200000e+01 : f32
    %106 = vector.broadcast %cst_67 : f32 to vector<1x512xf32>
    %107 = arith.cmpf olt, %12, %106 : vector<1x512xf32>
    %108 = arith.andi %105, %107 : vector<1x512xi1>
    %cst_68 = arith.constant 1.000000e+00 : f32
    %cst_69 = arith.constant 0.000000e+00 : f32
    %109 = vector.broadcast %cst_68 : f32 to vector<1x512xf32>
    %110 = vector.broadcast %cst_69 : f32 to vector<1x512xf32>
    %111 = arith.select %108, %109, %110 : vector<1x512xi1>, vector<1x512xf32>
    %c0_70 = arith.constant 0 : index
    %c4 = arith.constant 4 : index
    %112 = vector.load %arg3[%c0_70, %c4] : memref<16x6xf32, #tpu.memory_space<vmem>>, vector<16x1xf32>
    %c0_71 = arith.constant 0 : index
    %c5 = arith.constant 5 : index
    %113 = vector.load %arg3[%c0_71, %c5] : memref<16x6xf32, #tpu.memory_space<vmem>>, vector<16x1xf32>
    %114 = vector.broadcast %111 : vector<1x512xf32> to vector<16x512xf32>
    %115 = arith.mulf %103, %114 : vector<16x512xf32>
    %cst_72 = arith.constant dense<0.000000e+00> : vector<16xf32>
    %116 = vector.multi_reduction <add>, %115, %cst_72 [1] : vector<16x512xf32> to vector<16xf32>
    %117 = vector.shape_cast %116 : vector<16xf32> to vector<16x1xf32>
    %cst_73 = arith.constant 0.00347222225 : f32
    %118 = vector.broadcast %cst_73 : f32 to vector<16x1xf32>
    %119 = arith.mulf %117, %118 : vector<16x1xf32>
    %120 = vector.broadcast %119 : vector<16x1xf32> to vector<16x512xf32>
    %121 = arith.subf %103, %120 : vector<16x512xf32>
    %122 = vector.broadcast %111 : vector<1x512xf32> to vector<16x512xf32>
    %123 = arith.mulf %121, %122 : vector<16x512xf32>
    %124 = arith.mulf %123, %123 : vector<16x512xf32>
    %cst_74 = arith.constant dense<0.000000e+00> : vector<16xf32>
    %125 = vector.multi_reduction <add>, %124, %cst_74 [1] : vector<16x512xf32> to vector<16xf32>
    %126 = vector.shape_cast %125 : vector<16xf32> to vector<16x1xf32>
    %cst_75 = arith.constant 0.00347222225 : f32
    %127 = vector.broadcast %cst_75 : f32 to vector<16x1xf32>
    %128 = arith.mulf %126, %127 : vector<16x1xf32>
    %cst_76 = arith.constant 9.99999974E-6 : f32
    %129 = vector.broadcast %cst_76 : f32 to vector<16x1xf32>
    %130 = arith.addf %128, %129 : vector<16x1xf32>
    %131 = math.rsqrt %130 : vector<16x1xf32>
    %132 = arith.mulf %112, %131 : vector<16x1xf32>
    %133 = arith.mulf %119, %132 : vector<16x1xf32>
    %134 = arith.subf %113, %133 : vector<16x1xf32>
    %135 = vector.broadcast %132 : vector<16x1xf32> to vector<16x512xf32>
    %136 = arith.mulf %103, %135 : vector<16x512xf32>
    %137 = vector.broadcast %134 : vector<16x1xf32> to vector<16x512xf32>
    %138 = arith.addf %136, %137 : vector<16x512xf32>
    %cst_77 = arith.constant 0.000000e+00 : f32
    %139 = vector.broadcast %cst_77 : f32 to vector<16x512xf32>
    %140 = arith.maximumf %138, %139 : vector<16x512xf32>
    %c0_78 = arith.constant 0 : index
    %c0_79 = arith.constant 0 : index
    %141 = vector.load %arg4[%c0_78, %c0_79] : memref<16x512xf32, #tpu.memory_space<vmem>>, vector<16x512xf32>
    tpu.vector_store %arg4[%c0_78, %c0_79], %140 {strides = array<i32>} : memref<16x512xf32, #tpu.memory_space<vmem>>, vector<16x512xf32>,
    return
  }
}

</mosaic_0001>

<llo_original>
// kernel: encoder_forward.1
$region0: #{encoder_forward.1}
  #allocation0 [shape = 'u32[]', space=smem, size = 0x4, offset = 0x4, fixed_abs, tag = 'smem constant byte address 0x4 - core index']
  #allocation1 [shape = 'u32[144,128]{1,0:T(1,128)}', space=vmem, size = 0x12000, scoped, tag = 'internal scratch']
  #allocation2 [shape = 'f32[27,512]{1,0:T(8,128)}', space=vmem, size = 0x10000, scoped, tag = 'scratch operand']
  #allocation3 [shape = 'f32[54,512]{1,0:T(8,128)}', space=vmem, size = 0x1c000, scoped, tag = 'scratch operand']
  %s0 = inlined_call_operand.vmem [shape: f32[2,3,256], index: 0, kind: input, shape index: {}]
  %s1 = inlined_call_operand.vmem [shape: bf16[6,27], index: 1, kind: input, shape index: {}]
  %s2 = inlined_call_operand.vmem [shape: bf16[16,54], index: 2, kind: input, shape index: {}]
  %s3 = inlined_call_operand.vmem [shape: f32[16,6], index: 3, kind: input, shape index: {}]
  %s4 = inlined_call_operand.vmem [shape: f32[16,512], index: 4, kind: output, shape index: {}]
  %s5 = sld [smem:[#allocation0]]
  $region26: #{encoder_forward.1} parent=0
    _
  %s7 = ssub.s32 1, %s5
  %s8 = scalar_select 0, %s7, %s5
  // Predicated region
  $region2: #{encoder_forward.1} parent=0 // pred_check
    _
  $region3: #{encoder_forward.1} parent=0 // pred_check_branch
    %10 = sbr.rel (0) target = $region5
  $region4: #{encoder_forward.1} parent=0 // pred_region
    _
  $region5: #{encoder_forward.1} parent=0 // pred_fallthru
    _
  // Predicated region
  $region6: #{encoder_forward.1} parent=0 // pred_check
    _
  $region7: #{encoder_forward.1} parent=0 // pred_check_branch
    %12 = sbr.rel (0) target = $region9
  $region8: #{encoder_forward.1} parent=0 // pred_region
    _
  $region9: #{encoder_forward.1} parent=0 // pred_fallthru
    _
  // Predicated region
  $region10: #{encoder_forward.1} parent=0 // pred_check
    _
  $region11: #{encoder_forward.1} parent=0 // pred_check_branch
    %14 = sbr.rel (0) target = $region13
  $region12: #{encoder_forward.1} parent=0 // pred_region
    _
  $region13: #{encoder_forward.1} parent=0 // pred_fallthru
    _
  // Predicated region
  $region14: #{encoder_forward.1} parent=0 // pred_check
    _
  $region15: #{encoder_forward.1} parent=0 // pred_check_branch
    %16 = sbr.rel (0) target = $region17
  $region16: #{encoder_forward.1} parent=0 // pred_region
    _
  $region17: #{encoder_forward.1} parent=0 // pred_fallthru
    _
  %v18 = vld [vmem:[%s0] sm:$0x77]
  %s19 = scalar_lea.vmem %s0, 8
  %v20 = vld [vmem:[%s19] sm:$0x77]
  %v22 = vcombine.high %v18, %v18
  %v25 = vcombine.high %v20, %v20
  %v27 = vlaneseq
  %v28 = vand.u32 %v27, 127
  %v29 = vadd.s32 %v28, 128
  %v30 = vadd.s32 %v28, 256
  %v31 = vadd.s32 %v28, 384
  %v32 = vcvt.s32.f32 %v28
  %v33 = vcvt.s32.f32 %v29
  %v34 = vcvt.s32.f32 %v30
  %v35 = vcvt.s32.f32 %v31
  %v36 = vrcp.pop 16.0
  %v37 = vmul.f32 %v32, %v36
  %v38 = vmul.f32 %v33, %v36
  %v39 = vmul.f32 %v34, %v36
  %v40 = vmul.f32 %v35, %v36
  %v41 = vfloor.f32 %v37
  %v42 = vfloor.f32 %v38
  %v43 = vfloor.f32 %v39
  %v44 = vfloor.f32 %v40
  %v45 = vmul.f32 %v41, 16.0
  %v46 = vmul.f32 %v42, 16.0
  %v47 = vmul.f32 %v43, 16.0
  %v48 = vmul.f32 %v44, 16.0
  %v49 = vsub.f32 %v32, %v45
  %v50 = vsub.f32 %v33, %v46
  %v51 = vsub.f32 %v34, %v47
  %v52 = vsub.f32 %v35, %v48
  %v53 = vmul.f32 %v41, %v36
  %v54 = vmul.f32 %v42, %v36
  %v55 = vmul.f32 %v43, %v36
  %v56 = vmul.f32 %v44, %v36
  %v57 = vfloor.f32 %v53
  %v58 = vfloor.f32 %v54
  %v59 = vfloor.f32 %v55
  %v60 = vfloor.f32 %v56
  %v61 = vmul.f32 %v57, 16.0
  %v62 = vmul.f32 %v58, 16.0
  %v63 = vmul.f32 %v59, 16.0
  %v64 = vmul.f32 %v60, 16.0
  %v65 = vsub.f32 %v41, %v61
  %v66 = vsub.f32 %v42, %v62
  %v67 = vsub.f32 %v43, %v63
  %v68 = vsub.f32 %v44, %v64
  %v69 = vld [vmem:[%s3] sm:$0x3f]
  %70 = vst [vmem:[#allocation2] sm:$0x7] %v18
  %71 = vst [vmem:[#allocation2 + $0x8] sm:$0x7] %v22
  %72 = vst [vmem:[#allocation2 + $0x10] sm:$0x7] %v20
  %73 = vst [vmem:[#allocation2 + $0x18] sm:$0x7] %v25
  %74 = vrot.lane.b32.xlu0 %v18, 127
  %v75 = vpop.permute.xlu0 %74
  %76 = vrot.lane.b32.xlu0 %v22, 127
  %v77 = vpop.permute.xlu0 %76
  %78 = vrot.lane.b32.xlu0 %v20, 127
  %v79 = vpop.permute.xlu0 %78
  %80 = vrot.lane.b32.xlu0 %v25, 127
  %v81 = vpop.permute.xlu0 %80
  %vm82 = vcmp.lt.s32.totalorder %v28, 127
  %v83 = vsel %vm82, %v79, %v81
  %v84 = vsel %vm82, %v77, %v79
  %v85 = vsel %vm82, %v75, %v77
  %v86 = vsel %vm82, %v81, %v75
  %v91 = vrot.slane %v85, 5
  %v92 = vrot.slane %v84, 5
  %v93 = vrot.slane %v83, 5
  %v94 = vrot.slane %v86, 5
  %99 = vst [vmem:[#allocation2] sm:$0x38] %v91
  %100 = vst [vmem:[#allocation2 + $0x8] sm:$0x38] %v92
  %101 = vst [vmem:[#allocation2 + $0x10] sm:$0x38] %v93
  %102 = vst [vmem:[#allocation2 + $0x18] sm:$0x38] %v94
  %103 = vrot.lane.b32.xlu0 %v18, 126
  %v104 = vpop.permute.xlu0 %103
  %105 = vrot.lane.b32.xlu0 %v22, 126
  %v106 = vpop.permute.xlu0 %105
  %107 = vrot.lane.b32.xlu0 %v20, 126
  %v108 = vpop.permute.xlu0 %107
  %109 = vrot.lane.b32.xlu0 %v25, 126
  %v110 = vpop.permute.xlu0 %109
  %vm111 = vcmp.lt.s32.totalorder %v28, 126
  %v112 = vsel %vm111, %v108, %v110
  %v113 = vsel %vm111, %v106, %v108
  %v114 = vsel %vm111, %v104, %v106
  %v115 = vsel %vm111, %v110, %v104
  %v120 = vrot.slane %v114, 2
  %v121 = vrot.slane %v113, 2
  %v122 = vrot.slane %v112, 2
  %v123 = vrot.slane %v115, 2
  %128 = vst [vmem:[#allocation2] sm:$0xc0] %v120
  %129 = vst [vmem:[#allocation2 + $0x8] sm:$0xc0] %v121
  %130 = vst [vmem:[#allocation2 + $0x10] sm:$0xc0] %v122
  %131 = vst [vmem:[#allocation2 + $0x18] sm:$0xc0] %v123
  %132 = vst [vmem:[#allocation2 + $0x20] sm:$0x1] %v120
  %133 = vst [vmem:[#allocation2 + $0x28] sm:$0x1] %v121
  %134 = vst [vmem:[#allocation2 + $0x30] sm:$0x1] %v122
  %135 = vst [vmem:[#allocation2 + $0x38] sm:$0x1] %v123
  %136 = vrot.lane.b32.xlu0 %v18, 112
  %v137 = vpop.permute.xlu0 %136
  %138 = vrot.lane.b32.xlu0 %v22, 112
  %v139 = vpop.permute.xlu0 %138
  %140 = vrot.lane.b32.xlu0 %v20, 112
  %v141 = vpop.permute.xlu0 %140
  %142 = vrot.lane.b32.xlu0 %v25, 112
  %v143 = vpop.permute.xlu0 %142
  %vm144 = vcmp.lt.s32.totalorder %v28, 112
  %v145 = vsel %vm144, %v141, %v143
  %v146 = vsel %vm144, %v139, %v141
  %v147 = vsel %vm144, %v137, %v139
  %v148 = vsel %vm144, %v143, %v137
  %v153 = vrot.slane %v147, 7
  %v154 = vrot.slane %v146, 7
  %v155 = vrot.slane %v145, 7
  %v156 = vrot.slane %v148, 7
  %161 = vst [vmem:[#allocation2 + $0x20] sm:$0xe] %v153
  %162 = vst [vmem:[#allocation2 + $0x28] sm:$0xe] %v154
  %163 = vst [vmem:[#allocation2 + $0x30] sm:$0xe] %v155
  %164 = vst [vmem:[#allocation2 + $0x38] sm:$0xe] %v156
  %165 = vrot.lane.b32.xlu0 %v18, 111
  %v166 = vpop.permute.xlu0 %165
  %167 = vrot.lane.b32.xlu0 %v22, 111
  %v168 = vpop.permute.xlu0 %167
  %169 = vrot.lane.b32.xlu0 %v20, 111
  %v170 = vpop.permute.xlu0 %169
  %171 = vrot.lane.b32.xlu0 %v25, 111
  %v172 = vpop.permute.xlu0 %171
  %vm173 = vcmp.lt.s32.totalorder %v28, 111
  %v174 = vsel %vm173, %v170, %v172
  %v175 = vsel %vm173, %v168, %v170
  %v176 = vsel %vm173, %v166, %v168
  %v177 = vsel %vm173, %v172, %v166
  %v182 = vrot.slane %v176, 4
  %v183 = vrot.slane %v175, 4
  %v184 = vrot.slane %v174, 4
  %v185 = vrot.slane %v177, 4
  %190 = vst [vmem:[#allocation2 + $0x20] sm:$0x70] %v182
  %191 = vst [vmem:[#allocation2 + $0x28] sm:$0x70] %v183
  %192 = vst [vmem:[#allocation2 + $0x30] sm:$0x70] %v184
  %193 = vst [vmem:[#allocation2 + $0x38] sm:$0x70] %v185
  %194 = vrot.lane.b32.xlu0 %v18, 110
  %v195 = vpop.permute.xlu0 %194
  %196 = vrot.lane.b32.xlu0 %v22, 110
  %v197 = vpop.permute.xlu0 %196
  %198 = vrot.lane.b32.xlu0 %v20, 110
  %v199 = vpop.permute.xlu0 %198
  %200 = vrot.lane.b32.xlu0 %v25, 110
  %v201 = vpop.permute.xlu0 %200
  %vm202 = vcmp.lt.s32.totalorder %v28, 110
  %v203 = vsel %vm202, %v199, %v201
  %v204 = vsel %vm202, %v197, %v199
  %v205 = vsel %vm202, %v195, %v197
  %v206 = vsel %vm202, %v201, %v195
  %v211 = vrot.slane %v205, 1
  %v212 = vrot.slane %v204, 1
  %v213 = vrot.slane %v203, 1
  %v214 = vrot.slane %v206, 1
  %219 = vst [vmem:[#allocation2 + $0x20] sm:$0x80] %v211
  %220 = vst [vmem:[#allocation2 + $0x28] sm:$0x80] %v212
  %221 = vst [vmem:[#allocation2 + $0x30] sm:$0x80] %v213
  %222 = vst [vmem:[#allocation2 + $0x38] sm:$0x80] %v214
  %223 = vst [vmem:[#allocation2 + $0x40] sm:$0x3] %v211
  %224 = vst [vmem:[#allocation2 + $0x48] sm:$0x3] %v212
  %225 = vst [vmem:[#allocation2 + $0x50] sm:$0x3] %v213
  %226 = vst [vmem:[#allocation2 + $0x58] sm:$0x3] %v214
  %227 = vrot.lane.b32.xlu0 %v18, 96
  %v228 = vpop.permute.xlu0 %227
  %229 = vrot.lane.b32.xlu0 %v22, 96
  %v230 = vpop.permute.xlu0 %229
  %231 = vrot.lane.b32.xlu0 %v20, 96
  %v232 = vpop.permute.xlu0 %231
  %233 = vrot.lane.b32.xlu0 %v25, 96
  %v234 = vpop.permute.xlu0 %233
  %vm235 = vcmp.lt.s32.totalorder %v28, 96
  %v236 = vsel %vm235, %v232, %v234
  %v237 = vsel %vm235, %v230, %v232
  %v238 = vsel %vm235, %v228, %v230
  %v239 = vsel %vm235, %v234, %v228
  %v244 = vrot.slane %v238, 6
  %v245 = vrot.slane %v237, 6
  %v246 = vrot.slane %v236, 6
  %v247 = vrot.slane %v239, 6
  %252 = vst [vmem:[#allocation2 + $0x40] sm:$0x1c] %v244
  %253 = vst [vmem:[#allocation2 + $0x48] sm:$0x1c] %v245
  %254 = vst [vmem:[#allocation2 + $0x50] sm:$0x1c] %v246
  %255 = vst [vmem:[#allocation2 + $0x58] sm:$0x1c] %v247
  %256 = vrot.lane.b32.xlu0 %v18, 95
  %v257 = vpop.permute.xlu0 %256
  %258 = vrot.lane.b32.xlu0 %v22, 95
  %v259 = vpop.permute.xlu0 %258
  %260 = vrot.lane.b32.xlu0 %v20, 95
  %v261 = vpop.permute.xlu0 %260
  %262 = vrot.lane.b32.xlu0 %v25, 95
  %v263 = vpop.permute.xlu0 %262
  %vm264 = vcmp.lt.s32.totalorder %v28, 95
  %v265 = vsel %vm264, %v261, %v263
  %v266 = vsel %vm264, %v259, %v261
  %v267 = vsel %vm264, %v257, %v259
  %v268 = vsel %vm264, %v263, %v257
  %v273 = vrot.slane %v267, 3
  %v274 = vrot.slane %v266, 3
  %v275 = vrot.slane %v265, 3
  %v276 = vrot.slane %v268, 3
  %281 = vst [vmem:[#allocation2 + $0x40] sm:$0xe0] %v273
  %282 = vst [vmem:[#allocation2 + $0x48] sm:$0xe0] %v274
  %283 = vst [vmem:[#allocation2 + $0x50] sm:$0xe0] %v275
  %284 = vst [vmem:[#allocation2 + $0x58] sm:$0xe0] %v276
  %285 = vrot.lane.b32.xlu0 %v18, 94
  %v286 = vpop.permute.xlu0 %285
  %287 = vrot.lane.b32.xlu0 %v22, 94
  %v288 = vpop.permute.xlu0 %287
  %289 = vrot.lane.b32.xlu0 %v20, 94
  %v290 = vpop.permute.xlu0 %289
  %291 = vrot.lane.b32.xlu0 %v25, 94
  %v292 = vpop.permute.xlu0 %291
  %vm293 = vcmp.lt.s32.totalorder %v28, 94
  %v294 = vsel %vm293, %v290, %v292
  %v295 = vsel %vm293, %v288, %v290
  %v296 = vsel %vm293, %v286, %v288
  %v297 = vsel %vm293, %v292, %v286
  %298 = vst [vmem:[#allocation2 + $0x60] sm:$0x7] %v296
  %299 = vst [vmem:[#allocation2 + $0x68] sm:$0x7] %v295
  %300 = vst [vmem:[#allocation2 + $0x70] sm:$0x7] %v294
  %301 = vst [vmem:[#allocation2 + $0x78] sm:$0x7] %v297
  %v302 = vld [vmem:[#allocation2] sm:$0xff]
  %v303 = vld [vmem:[#allocation2 + $0x8] sm:$0xff]
  %v304 = vld [vmem:[#allocation2 + $0x10] sm:$0xff]
  %v305 = vld [vmem:[#allocation2 + $0x18] sm:$0xff]
  %v306 = vld [vmem:[#allocation2 + $0x20] sm:$0xff]
  %v307 = vld [vmem:[#allocation2 + $0x28] sm:$0xff]
  %v308 = vld [vmem:[#allocation2 + $0x30] sm:$0xff]
  %v309 = vld [vmem:[#allocation2 + $0x38] sm:$0xff]
  %v310 = vld [vmem:[#allocation2 + $0x40] sm:$0xff]
  %v311 = vld [vmem:[#allocation2 + $0x48] sm:$0xff]
  %v312 = vld [vmem:[#allocation2 + $0x50] sm:$0xff]
  %v313 = vld [vmem:[#allocation2 + $0x58] sm:$0xff]
  %v314 = vld [vmem:[#allocation2 + $0x60] sm:$0x7]
  %v315 = vld [vmem:[#allocation2 + $0x68] sm:$0x7]
  %v316 = vld [vmem:[#allocation2 + $0x70] sm:$0x7]
  %v317 = vld [vmem:[#allocation2 + $0x78] sm:$0x7]
  %v318 = vpack.c.bf16 %v306, %v302
  %v319 = vpack.c.bf16 %v307, %v303
  %v320 = vpack.c.bf16 %v308, %v304
  %v321 = vpack.c.bf16 %v309, %v305
  %v322 = vpack.c.bf16 %v314, %v310
  %v323 = vpack.c.bf16 %v315, %v311
  %v324 = vpack.c.bf16 %v316, %v312
  %v325 = vpack.c.bf16 %v317, %v313
  %v326 = vld [vmem:[%s1] sm:$0x7]
  %328 = vset.pattern.permute.xlu0 0
  %329 = vperm.xlu0 %328, %v69
  %v330 = vpop.permute.xlu0 %329
  %vm332 = vcmask 220160
  %v334 = vsel %vm332, %v326, 0
  %vm336 = vcmask 1044480
  %vm337 = vcmask 1045504
  %v338 = vsel %vm336, 4294967295, 65535
  %v339 = vsel %vm337, %v338, 0
  %v341 = vand.u32 %v322, %v339
  %v344 = vand.u32 %v323, %v339
  %v347 = vand.u32 %v324, %v339
  %v350 = vand.u32 %v325, %v339
  %352 = vmatprep.subr.bf16.mxu0 0
  %353 = vmatpush1.bf16.msra.mxu0 0
  %354 = vmatprep.subr.bf16.mxu0 0
  %355 = vmatpush1.bf16.msra.mxu0 0
  %356 = vmatprep.subr.bf16.mxu0 0
  %357 = vmatpush1.bf16.msra.mxu0 0
  %358 = vmatprep.subr.bf16.mxu0 0
  %359 = vmatpush1.bf16.msra.mxu0 0
  %360 = vmatprep.subr.bf16.mxu0 0
  %361 = vmatpush1.bf16.msra.mxu0 0
  %362 = vmatprep.subr.bf16.mxu0 0
  %363 = vmatpush1.bf16.msra.mxu0 0
  %364 = vmatprep.subr.bf16.mxu0 %v344
  %365 = vmatpush1.bf16.msra.mxu0 %v341
  %366 = vmatprep.subr.bf16.mxu0 %v319
  %367 = vmatpush1.bf16.msra.mxu0 %v318
  %368 = vmatprep.subr.bf16.mxu0 0
  %369 = vmatpush2.bf16.msra.mxu0 0
  %370 = vmatprep.subr.bf16.mxu0 0
  %371 = vmatpush2.bf16.msra.mxu0 0
  %372 = vmatprep.subr.bf16.mxu0 0
  %373 = vmatpush2.bf16.msra.mxu0 0
  %374 = vmatprep.subr.bf16.mxu0 0
  %375 = vmatpush2.bf16.msra.mxu0 0
  %376 = vmatprep.subr.bf16.mxu0 0
  %377 = vmatpush2.bf16.msra.mxu0 0
  %378 = vmatprep.subr.bf16.mxu0 0
  %379 = vmatpush2.bf16.msra.mxu0 0
  %380 = vmatprep.subr.bf16.mxu0 0
  %381 = vmatpush2.bf16.msra.mxu0 0
  %382 = vmatprep.subr.bf16.mxu0 0
  %383 = vmatpush2.bf16.msra.mxu0 0
  %384 = vmatprep.mubr.bf16.mxu0 0
  %385 = vmatmul.mubr.bf16.gmra.mxu0 %v334
  %v386 = vpop.f32.mrf.mxu0
  %v387 = vadd.f32 %v330, %v386
  %v388 = vpop.f32.mrf.mxu0
  %v389 = vadd.f32 %v330, %v388
  %v390 = vpop.f32.mrf.mxu0
  %v391 = vpop.f32.mrf.mxu0
  %392 = vdwg.mxu0
  %393 = vmatprep.subr.bf16.mxu0 0
  %394 = vmatpush1.bf16.msra.mxu0 0
  %395 = vmatprep.subr.bf16.mxu0 0
  %396 = vmatpush1.bf16.msra.mxu0 0
  %397 = vmatprep.subr.bf16.mxu0 0
  %398 = vmatpush1.bf16.msra.mxu0 0
  %399 = vmatprep.subr.bf16.mxu0 0
  %400 = vmatpush1.bf16.msra.mxu0 0
  %401 = vmatprep.subr.bf16.mxu0 0
  %402 = vmatpush1.bf16.msra.mxu0 0
  %403 = vmatprep.subr.bf16.mxu0 0
  %404 = vmatpush1.bf16.msra.mxu0 0
  %405 = vmatprep.subr.bf16.mxu0 %v350
  %406 = vmatpush1.bf16.msra.mxu0 %v347
  %407 = vmatprep.subr.bf16.mxu0 %v321
  %408 = vmatpush1.bf16.msra.mxu0 %v320
  %409 = vmatprep.subr.bf16.mxu0 0
  %410 = vmatpush2.bf16.msra.mxu0 0
  %411 = vmatprep.subr.bf16.mxu0 0
  %412 = vmatpush2.bf16.msra.mxu0 0
  %413 = vmatprep.subr.bf16.mxu0 0
  %414 = vmatpush2.bf16.msra.mxu0 0
  %415 = vmatprep.subr.bf16.mxu0 0
  %416 = vmatpush2.bf16.msra.mxu0 0
  %417 = vmatprep.subr.bf16.mxu0 0
  %418 = vmatpush2.bf16.msra.mxu0 0
  %419 = vmatprep.subr.bf16.mxu0 0
  %420 = vmatpush2.bf16.msra.mxu0 0
  %421 = vmatprep.subr.bf16.mxu0 0
  %422 = vmatpush2.bf16.msra.mxu0 0
  %423 = vmatprep.subr.bf16.mxu0 0
  %424 = vmatpush2.bf16.msra.mxu0 0
  %425 = vmatprep.mubr.bf16.mxu0 0
  %426 = vmatmul.mubr.bf16.gmra.mxu0 %v334
  %v427 = vpop.f32.mrf.mxu0
  %v428 = vadd.f32 %v330, %v427
  %v429 = vpop.f32.mrf.mxu0
  %v430 = vadd.f32 %v330, %v429
  %v431 = vpop.f32.mrf.mxu0
  %v432 = vpop.f32.mrf.mxu0
  %433 = vdwg.mxu0
  %vm434 = vcmp.lt.f32.partialorder %v65, 14.0
  %vm435 = vcmp.lt.f32.partialorder %v66, 14.0
  %vm436 = vcmp.lt.f32.partialorder %v67, 14.0
  %vm437 = vcmp.lt.f32.partialorder %v68, 14.0
  %vm438 = vcmp.lt.f32.partialorder %v49, 14.0
  %vm439 = vcmp.lt.f32.partialorder %v50, 14.0
  %vm440 = vcmp.lt.f32.partialorder %v51, 14.0
  %vm441 = vcmp.lt.f32.partialorder %v52, 14.0
  %vm442 = vmand %vm434, %vm438
  %vm443 = vmand %vm435, %vm439
  %vm444 = vmand %vm436, %vm440
  %vm445 = vmand %vm437, %vm441
  %v446 = vsel %vm442, 1.0, 0.0
  %v447 = vsel %vm443, 1.0, 0.0
  %v448 = vsel %vm444, 1.0, 0.0
  %v449 = vsel %vm445, 1.0, 0.0
  %v450 = vld [vmem:[%s3] sm:$0x3f]
  %v451 = vmul.f32 %v387, %v446
  %v452 = vmul.f32 %v389, %v447
  %v453 = vmul.f32 %v428, %v448
  %v454 = vmul.f32 %v430, %v449
  %v455 = vsel %vm337, %v451, 0.0
  %v456 = vsel %vm337, %v452, 0.0
  %v457 = vadd.f32 %v455, %v456
  %v458 = vsel %vm337, %v453, 0.0
  %v459 = vadd.f32 %v457, %v458
  %v460 = vsel %vm337, %v454, 0.0
  %v461 = vadd.f32 %v459, %v460
  %462 = vadd.xlane.f32.xlu0 %v461
  %v463 = vpop.xlane.xlu0 %462
  %v464 = vmul.f32 %v463, 0.0025510204
  %v465 = vsub.f32 %v387, %v464
  %v466 = vsub.f32 %v389, %v464
  %v467 = vsub.f32 %v428, %v464
  %v468 = vsub.f32 %v430, %v464
  %v469 = vmul.f32 %v465, %v446
  %v470 = vmul.f32 %v466, %v447
  %v471 = vmul.f32 %v467, %v448
  %v472 = vmul.f32 %v468, %v449
  %v473 = vmul.f32 %v469, %v469
  %v474 = vmul.f32 %v470, %v470
  %v475 = vmul.f32 %v471, %v471
  %v476 = vmul.f32 %v472, %v472
  %v477 = vsel %vm337, %v473, 0.0
  %v478 = vsel %vm337, %v474, 0.0
  %v479 = vadd.f32 %v477, %v478
  %v480 = vsel %vm337, %v475, 0.0
  %v481 = vadd.f32 %v479, %v480
  %v482 = vsel %vm337, %v476, 0.0
  %v483 = vadd.f32 %v481, %v482
  %484 = vadd.xlane.f32.xlu0 %v483
  %v485 = vpop.xlane.xlu0 %484
  %v486 = vmul.f32 %v485, 0.0025510204
  %v487 = vadd.f32 %v486, 1e-05
  %v488 = vrsqrt.pop %v487
  %v489 = vmul.f32 %v450, %v488
  %v490 = vmul.f32 %v464, %v489
  %492 = vrot.lane.b32.xlu0 %v490, 1
  %v493 = vpop.permute.xlu0 %492
  %v495 = vsub.f32 %v450, %v493
  %497 = vset.pattern.permute.xlu0 1
  %498 = vperm.xlu0 %497, %v489
  %v499 = vpop.permute.xlu0 %498
  %v501 = vmul.f32 %v387, %v499
  %v502 = vmul.f32 %v389, %v499
  %v503 = vmul.f32 %v428, %v499
  %v504 = vmul.f32 %v430, %v499
  %506 = vset.pattern.permute.xlu0 2
  %507 = vperm.xlu0 %506, %v495
  %v508 = vpop.permute.xlu0 %507
  %v510 = vadd.f32 %v501, %v508
  %v511 = vadd.f32 %v502, %v508
  %v512 = vadd.f32 %v503, %v508
  %v513 = vadd.f32 %v504, %v508
  %v514 = vmax.f32 %v510, 0.0
  %v515 = vmax.f32 %v511, 0.0
  %v516 = vmax.f32 %v512, 0.0
  %v517 = vmax.f32 %v513, 0.0
  %v518 = vld [vmem:[%s3] sm:$0xff]
  %v519 = vld [vmem:[%s3 + $0x8] sm:$0xff]
  %520 = vst [vmem:[#allocation3] sm:$0x3f] %v514
  %521 = vst [vmem:[#allocation3 + $0x8] sm:$0x3f] %v515
  %522 = vst [vmem:[#allocation3 + $0x10] sm:$0x3f] %v516
  %523 = vst [vmem:[#allocation3 + $0x18] sm:$0x3f] %v517
  %524 = vrot.lane.b32.xlu0 %v514, 127
  %v525 = vpop.permute.xlu0 %524
  %526 = vrot.lane.b32.xlu0 %v515, 127
  %v527 = vpop.permute.xlu0 %526
  %528 = vrot.lane.b32.xlu0 %v516, 127
  %v529 = vpop.permute.xlu0 %528
  %530 = vrot.lane.b32.xlu0 %v517, 127
  %v531 = vpop.permute.xlu0 %530
  %v532 = vsel %vm82, %v529, %v531
  %v533 = vsel %vm82, %v527, %v529
  %v534 = vsel %vm82, %v525, %v527
  %v535 = vsel %vm82, %v531, %v525
  %v540 = vrot.slane %v534, 2
  %v541 = vrot.slane %v533, 2
  %v542 = vrot.slane %v532, 2
  %v543 = vrot.slane %v535, 2
  %548 = vst [vmem:[#allocation3] sm:$0xc0] %v540
  %549 = vst [vmem:[#allocation3 + $0x8] sm:$0xc0] %v541
  %550 = vst [vmem:[#allocation3 + $0x10] sm:$0xc0] %v542
  %551 = vst [vmem:[#allocation3 + $0x18] sm:$0xc0] %v543
  %552 = vst [vmem:[#allocation3 + $0x20] sm:$0xf] %v540
  %553 = vst [vmem:[#allocation3 + $0x28] sm:$0xf] %v541
  %554 = vst [vmem:[#allocation3 + $0x30] sm:$0xf] %v542
  %555 = vst [vmem:[#allocation3 + $0x38] sm:$0xf] %v543
  %556 = vrot.lane.b32.xlu0 %v514, 126
  %v557 = vpop.permute.xlu0 %556
  %558 = vrot.lane.b32.xlu0 %v515, 126
  %v559 = vpop.permute.xlu0 %558
  %560 = vrot.lane.b32.xlu0 %v516, 126
  %v561 = vpop.permute.xlu0 %560
  %562 = vrot.lane.b32.xlu0 %v517, 126
  %v563 = vpop.permute.xlu0 %562
  %v564 = vsel %vm111, %v561, %v563
  %v565 = vsel %vm111, %v559, %v561
  %v566 = vsel %vm111, %v557, %v559
  %v567 = vsel %vm111, %v563, %v557
  %v572 = vrot.slane %v566, 4
  %v573 = vrot.slane %v565, 4
  %v574 = vrot.slane %v564, 4
  %v575 = vrot.slane %v567, 4
  %580 = vst [vmem:[#allocation3 + $0x20] sm:$0xf0] %v572
  %581 = vst [vmem:[#allocation3 + $0x28] sm:$0xf0] %v573
  %582 = vst [vmem:[#allocation3 + $0x30] sm:$0xf0] %v574
  %583 = vst [vmem:[#allocation3 + $0x38] sm:$0xf0] %v575
  %584 = vst [vmem:[#allocation3 + $0x40] sm:$0x3] %v572
  %585 = vst [vmem:[#allocation3 + $0x48] sm:$0x3] %v573
  %586 = vst [vmem:[#allocation3 + $0x50] sm:$0x3] %v574
  %587 = vst [vmem:[#allocation3 + $0x58] sm:$0x3] %v575
  %588 = vrot.lane.b32.xlu0 %v514, 112
  %v589 = vpop.permute.xlu0 %588
  %590 = vrot.lane.b32.xlu0 %v515, 112
  %v591 = vpop.permute.xlu0 %590
  %592 = vrot.lane.b32.xlu0 %v516, 112
  %v593 = vpop.permute.xlu0 %592
  %594 = vrot.lane.b32.xlu0 %v517, 112
  %v595 = vpop.permute.xlu0 %594
  %v596 = vsel %vm144, %v593, %v595
  %v597 = vsel %vm144, %v591, %v593
  %v598 = vsel %vm144, %v589, %v591
  %v599 = vsel %vm144, %v595, %v589
  %v604 = vrot.slane %v598, 6
  %v605 = vrot.slane %v597, 6
  %v606 = vrot.slane %v596, 6
  %v607 = vrot.slane %v599, 6
  %612 = vst [vmem:[#allocation3 + $0x40] sm:$0xfc] %v604
  %613 = vst [vmem:[#allocation3 + $0x48] sm:$0xfc] %v605
  %614 = vst [vmem:[#allocation3 + $0x50] sm:$0xfc] %v606
  %615 = vst [vmem:[#allocation3 + $0x58] sm:$0xfc] %v607
  %616 = vrot.lane.b32.xlu0 %v514, 111
  %v617 = vpop.permute.xlu0 %616
  %618 = vrot.lane.b32.xlu0 %v515, 111
  %v619 = vpop.permute.xlu0 %618
  %620 = vrot.lane.b32.xlu0 %v516, 111
  %v621 = vpop.permute.xlu0 %620
  %622 = vrot.lane.b32.xlu0 %v517, 111
  %v623 = vpop.permute.xlu0 %622
  %v624 = vsel %vm173, %v621, %v623
  %v625 = vsel %vm173, %v619, %v621
  %v626 = vsel %vm173, %v617, %v619
  %v627 = vsel %vm173, %v623, %v617
  %628 = vst [vmem:[#allocation3 + $0x60] sm:$0x3f] %v626
  %629 = vst [vmem:[#allocation3 + $0x68] sm:$0x3f] %v625
  %630 = vst [vmem:[#allocation3 + $0x70] sm:$0x3f] %v624
  %631 = vst [vmem:[#allocation3 + $0x78] sm:$0x3f] %v627
  %632 = vrot.lane.b32.xlu0 %v514, 110
  %v633 = vpop.permute.xlu0 %632
  %634 = vrot.lane.b32.xlu0 %v515, 110
  %v635 = vpop.permute.xlu0 %634
  %636 = vrot.lane.b32.xlu0 %v516, 110
  %v637 = vpop.permute.xlu0 %636
  %638 = vrot.lane.b32.xlu0 %v517, 110
  %v639 = vpop.permute.xlu0 %638
  %v640 = vsel %vm202, %v637, %v639
  %v641 = vsel %vm202, %v635, %v637
  %v642 = vsel %vm202, %v633, %v635
  %v643 = vsel %vm202, %v639, %v633
  %v648 = vrot.slane %v642, 2
  %v649 = vrot.slane %v641, 2
  %v650 = vrot.slane %v640, 2
  %v651 = vrot.slane %v643, 2
  %656 = vst [vmem:[#allocation3 + $0x60] sm:$0xc0] %v648
  %657 = vst [vmem:[#allocation3 + $0x68] sm:$0xc0] %v649
  %658 = vst [vmem:[#allocation3 + $0x70] sm:$0xc0] %v650
  %659 = vst [vmem:[#allocation3 + $0x78] sm:$0xc0] %v651
  %660 = vst [vmem:[#allocation3 + $0x80] sm:$0xf] %v648
  %661 = vst [vmem:[#allocation3 + $0x88] sm:$0xf] %v649
  %662 = vst [vmem:[#allocation3 + $0x90] sm:$0xf] %v650
  %663 = vst [vmem:[#allocation3 + $0x98] sm:$0xf] %v651
  %664 = vrot.lane.b32.xlu0 %v514, 96
  %v665 = vpop.permute.xlu0 %664
  %666 = vrot.lane.b32.xlu0 %v515, 96
  %v667 = vpop.permute.xlu0 %666
  %668 = vrot.lane.b32.xlu0 %v516, 96
  %v669 = vpop.permute.xlu0 %668
  %670 = vrot.lane.b32.xlu0 %v517, 96
  %v671 = vpop.permute.xlu0 %670
  %v672 = vsel %vm235, %v669, %v671
  %v673 = vsel %vm235, %v667, %v669
  %v674 = vsel %vm235, %v665, %v667
  %v675 = vsel %vm235, %v671, %v665
  %v680 = vrot.slane %v674, 4
  %v681 = vrot.slane %v673, 4
  %v682 = vrot.slane %v672, 4
  %v683 = vrot.slane %v675, 4
  %688 = vst [vmem:[#allocation3 + $0x80] sm:$0xf0] %v680
  %689 = vst [vmem:[#allocation3 + $0x88] sm:$0xf0] %v681
  %690 = vst [vmem:[#allocation3 + $0x90] sm:$0xf0] %v682
  %691 = vst [vmem:[#allocation3 + $0x98] sm:$0xf0] %v683
  %692 = vst [vmem:[#allocation3 + $0xa0] sm:$0x3] %v680
  %693 = vst [vmem:[#allocation3 + $0xa8] sm:$0x3] %v681
  %694 = vst [vmem:[#allocation3 + $0xb0] sm:$0x3] %v682
  %695 = vst [vmem:[#allocation3 + $0xb8] sm:$0x3] %v683
  %696 = vrot.lane.b32.xlu0 %v514, 95
  %v697 = vpop.permute.xlu0 %696
  %698 = vrot.lane.b32.xlu0 %v515, 95
  %v699 = vpop.permute.xlu0 %698
  %700 = vrot.lane.b32.xlu0 %v516, 95
  %v701 = vpop.permute.xlu0 %700
  %702 = vrot.lane.b32.xlu0 %v517, 95
  %v703 = vpop.permute.xlu0 %702
  %v704 = vsel %vm264, %v701, %v703
  %v705 = vsel %vm264, %v699, %v701
  %v706 = vsel %vm264, %v697, %v699
  %v707 = vsel %vm264, %v703, %v697
  %v712 = vrot.slane %v706, 6
  %v713 = vrot.slane %v705, 6
  %v714 = vrot.slane %v704, 6
  %v715 = vrot.slane %v707, 6
  %720 = vst [vmem:[#allocation3 + $0xa0] sm:$0xfc] %v712
  %721 = vst [vmem:[#allocation3 + $0xa8] sm:$0xfc] %v713
  %722 = vst [vmem:[#allocation3 + $0xb0] sm:$0xfc] %v714
  %723 = vst [vmem:[#allocation3 + $0xb8] sm:$0xfc] %v715
  %724 = vrot.lane.b32.xlu0 %v514, 94
  %v725 = vpop.permute.xlu0 %724
  %726 = vrot.lane.b32.xlu0 %v515, 94
  %v727 = vpop.permute.xlu0 %726
  %728 = vrot.lane.b32.xlu0 %v516, 94
  %v729 = vpop.permute.xlu0 %728
  %730 = vrot.lane.b32.xlu0 %v517, 94
  %v731 = vpop.permute.xlu0 %730
  %v732 = vsel %vm293, %v729, %v731
  %v733 = vsel %vm293, %v727, %v729
  %v734 = vsel %vm293, %v725, %v727
  %v735 = vsel %vm293, %v731, %v725
  %736 = vst [vmem:[#allocation3 + $0xc0] sm:$0x3f] %v734
  %737 = vst [vmem:[#allocation3 + $0xc8] sm:$0x3f] %v733
  %738 = vst [vmem:[#allocation3 + $0xd0] sm:$0x3f] %v732
  %739 = vst [vmem:[#allocation3 + $0xd8] sm:$0x3f] %v735
  %v740 = vld [vmem:[#allocation3] sm:$0xff]
  %v741 = vld [vmem:[#allocation3 + $0x8] sm:$0xff]
  %v742 = vld [vmem:[#allocation3 + $0x10] sm:$0xff]
  %v743 = vld [vmem:[#allocation3 + $0x18] sm:$0xff]
  %v744 = vld [vmem:[#allocation3 + $0x20] sm:$0xff]
  %v745 = vld [vmem:[#allocation3 + $0x28] sm:$0xff]
  %v746 = vld [vmem:[#allocation3 + $0x30] sm:$0xff]
  %v747 = vld [vmem:[#allocation3 + $0x38] sm:$0xff]
  %v748 = vld [vmem:[#allocation3 + $0x40] sm:$0xff]
  %v749 = vld [vmem:[#allocation3 + $0x48] sm:$0xff]
  %v750 = vld [vmem:[#allocation3 + $0x50] sm:$0xff]
  %v751 = vld [vmem:[#allocation3 + $0x58] sm:$0xff]
  %v752 = vld [vmem:[#allocation3 + $0x60] sm:$0xff]
  %v753 = vld [vmem:[#allocation3 + $0x68] sm:$0xff]
  %v754 = vld [vmem:[#allocation3 + $0x70] sm:$0xff]
  %v755 = vld [vmem:[#allocation3 + $0x78] sm:$0xff]
  %v756 = vld [vmem:[#allocation3 + $0x80] sm:$0xff]
  %v757 = vld [vmem:[#allocation3 + $0x88] sm:$0xff]
  %v758 = vld [vmem:[#allocation3 + $0x90] sm:$0xff]
  %v759 = vld [vmem:[#allocation3 + $0x98] sm:$0xff]
  %v760 = vld [vmem:[#allocation3 + $0xa0] sm:$0xff]
  %v761 = vld [vmem:[#allocation3 + $0xa8] sm:$0xff]
  %v762 = vld [vmem:[#allocation3 + $0xb0] sm:$0xff]
  %v763 = vld [vmem:[#allocation3 + $0xb8] sm:$0xff]
  %v764 = vld [vmem:[#allocation3 + $0xc0] sm:$0x3f]
  %v765 = vld [vmem:[#allocation3 + $0xc8] sm:$0x3f]
  %v766 = vld [vmem:[#allocation3 + $0xd0] sm:$0x3f]
  %v767 = vld [vmem:[#allocation3 + $0xd8] sm:$0x3f]
  %v768 = vpack.c.bf16 %v744, %v740
  %v769 = vpack.c.bf16 %v745, %v741
  %v770 = vpack.c.bf16 %v746, %v742
  %v771 = vpack.c.bf16 %v747, %v743
  %v772 = vpack.c.bf16 %v752, %v748
  %v773 = vpack.c.bf16 %v753, %v749
  %v774 = vpack.c.bf16 %v754, %v750
  %v775 = vpack.c.bf16 %v755, %v751
  %v776 = vpack.c.bf16 %v760, %v756
  %v777 = vpack.c.bf16 %v761, %v757
  %v778 = vpack.c.bf16 %v762, %v758
  %v779 = vpack.c.bf16 %v763, %v759
  %v780 = vpack.c.bf16 %v764, %v764
  %v781 = vpack.c.bf16 %v765, %v765
  %v782 = vpack.c.bf16 %v766, %v766
  %v783 = vpack.c.bf16 %v767, %v767
  %v784 = vld [vmem:[%s2] sm:$0xf]
  %v785 = vld [vmem:[%s2 + $0x4] sm:$0xf]
  %787 = vset.pattern.permute.xlu0 3
  %788 = vperm.xlu0 %787, %v518
  %v789 = vpop.permute.xlu0 %788
  %792 = vset.pattern.permute.xlu0 3
  %793 = vperm.xlu0 %792, %v519
  %v794 = vpop.permute.xlu0 %793
  %v798 = vunpack.c.l.b16 %v784
  %v799 = vunpack.c.l.b16 %v785
  %v800 = vpack.c.b16 %v799, %v798
  %vm801 = vcmask 441344
  %v803 = vsel %vm801, %v800, 0
  %vm805 = vcmask 1042432
  %v807 = vsel %vm805, %v780, 0
  %v810 = vsel %vm805, %v781, 0
  %v813 = vsel %vm805, %v782, 0
  %v816 = vsel %vm805, %v783, 0
  %818 = vmatprep.subr.bf16.mxu0 0
  %819 = vmatpush1.bf16.msra.mxu0 0
  %820 = vmatprep.subr.bf16.mxu0 0
  %821 = vmatpush1.bf16.msra.mxu0 0
  %822 = vmatprep.subr.bf16.mxu0 0
  %823 = vmatpush1.bf16.msra.mxu0 0
  %824 = vmatprep.subr.bf16.mxu0 0
  %825 = vmatpush1.bf16.msra.mxu0 0
  %826 = vmatprep.subr.bf16.mxu0 %v810
  %827 = vmatpush1.bf16.msra.mxu0 %v807
  %828 = vmatprep.subr.bf16.mxu0 %v777
  %829 = vmatpush1.bf16.msra.mxu0 %v776
  %830 = vmatprep.subr.bf16.mxu0 %v773
  %831 = vmatpush1.bf16.msra.mxu0 %v772
  %832 = vmatprep.subr.bf16.mxu0 %v769
  %833 = vmatpush1.bf16.msra.mxu0 %v768
  %834 = vmatprep.subr.bf16.mxu0 0
  %835 = vmatpush2.bf16.msra.mxu0 0
  %836 = vmatprep.subr.bf16.mxu0 0
  %837 = vmatpush2.bf16.msra.mxu0 0
  %838 = vmatprep.subr.bf16.mxu0 0
  %839 = vmatpush2.bf16.msra.mxu0 0
  %840 = vmatprep.subr.bf16.mxu0 0
  %841 = vmatpush2.bf16.msra.mxu0 0
  %842 = vmatprep.subr.bf16.mxu0 0
  %843 = vmatpush2.bf16.msra.mxu0 0
  %844 = vmatprep.subr.bf16.mxu0 0
  %845 = vmatpush2.bf16.msra.mxu0 0
  %846 = vmatprep.subr.bf16.mxu0 0
  %847 = vmatpush2.bf16.msra.mxu0 0
  %848 = vmatprep.subr.bf16.mxu0 0
  %849 = vmatpush2.bf16.msra.mxu0 0
  %850 = vmatprep.mubr.bf16.mxu0 0
  %851 = vmatmul.mubr.bf16.gmra.mxu0 %v803
  %v852 = vpop.f32.mrf.mxu0
  %v853 = vadd.f32 %v789, %v852
  %v854 = vpop.f32.mrf.mxu0
  %v855 = vadd.f32 %v789, %v854
  %v856 = vpop.f32.mrf.mxu0
  %v857 = vadd.f32 %v794, %v856
  %v858 = vpop.f32.mrf.mxu0
  %v859 = vadd.f32 %v794, %v858
  %860 = vdwg.mxu0
  %861 = vmatprep.subr.bf16.mxu0 0
  %862 = vmatpush1.bf16.msra.mxu0 0
  %863 = vmatprep.subr.bf16.mxu0 0
  %864 = vmatpush1.bf16.msra.mxu0 0
  %865 = vmatprep.subr.bf16.mxu0 0
  %866 = vmatpush1.bf16.msra.mxu0 0
  %867 = vmatprep.subr.bf16.mxu0 0
  %868 = vmatpush1.bf16.msra.mxu0 0
  %869 = vmatprep.subr.bf16.mxu0 %v816
  %870 = vmatpush1.bf16.msra.mxu0 %v813
  %871 = vmatprep.subr.bf16.mxu0 %v779
  %872 = vmatpush1.bf16.msra.mxu0 %v778
  %873 = vmatprep.subr.bf16.mxu0 %v775
  %874 = vmatpush1.bf16.msra.mxu0 %v774
  %875 = vmatprep.subr.bf16.mxu0 %v771
  %876 = vmatpush1.bf16.msra.mxu0 %v770
  %877 = vmatprep.subr.bf16.mxu0 0
  %878 = vmatpush2.bf16.msra.mxu0 0
  %879 = vmatprep.subr.bf16.mxu0 0
  %880 = vmatpush2.bf16.msra.mxu0 0
  %881 = vmatprep.subr.bf16.mxu0 0
  %882 = vmatpush2.bf16.msra.mxu0 0
  %883 = vmatprep.subr.bf16.mxu0 0
  %884 = vmatpush2.bf16.msra.mxu0 0
  %885 = vmatprep.subr.bf16.mxu0 0
  %886 = vmatpush2.bf16.msra.mxu0 0
  %887 = vmatprep.subr.bf16.mxu0 0
  %888 = vmatpush2.bf16.msra.mxu0 0
  %889 = vmatprep.subr.bf16.mxu0 0
  %890 = vmatpush2.bf16.msra.mxu0 0
  %891 = vmatprep.subr.bf16.mxu0 0
  %892 = vmatpush2.bf16.msra.mxu0 0
  %893 = vmatprep.mubr.bf16.mxu0 0
  %894 = vmatmul.mubr.bf16.gmra.mxu0 %v803
  %v895 = vpop.f32.mrf.mxu0
  %v896 = vadd.f32 %v789, %v895
  %v897 = vpop.f32.mrf.mxu0
  %v898 = vadd.f32 %v789, %v897
  %v899 = vpop.f32.mrf.mxu0
  %v900 = vadd.f32 %v794, %v899
  %v901 = vpop.f32.mrf.mxu0
  %v902 = vadd.f32 %v794, %v901
  %903 = vdwg.mxu0
  %vm904 = vcmp.lt.f32.partialorder %v65, 12.0
  %vm905 = vcmp.lt.f32.partialorder %v66, 12.0
  %vm906 = vcmp.lt.f32.partialorder %v67, 12.0
  %vm907 = vcmp.lt.f32.partialorder %v68, 12.0
  %vm908 = vcmp.lt.f32.partialorder %v49, 12.0
  %vm909 = vcmp.lt.f32.partialorder %v50, 12.0
  %vm910 = vcmp.lt.f32.partialorder %v51, 12.0
  %vm911 = vcmp.lt.f32.partialorder %v52, 12.0
  %vm912 = vmand %vm904, %vm908
  %vm913 = vmand %vm905, %vm909
  %vm914 = vmand %vm906, %vm910
  %vm915 = vmand %vm907, %vm911
  %v916 = vsel %vm912, 1.0, 0.0
  %v917 = vsel %vm913, 1.0, 0.0
  %v918 = vsel %vm914, 1.0, 0.0
  %v919 = vsel %vm915, 1.0, 0.0
  %v920 = vld [vmem:[%s3] sm:$0xff]
  %v921 = vld [vmem:[%s3 + $0x8] sm:$0xff]
  %v922 = vmul.f32 %v853, %v916
  %v923 = vmul.f32 %v855, %v917
  %v924 = vmul.f32 %v896, %v918
  %v925 = vmul.f32 %v898, %v919
  %v926 = vmul.f32 %v857, %v916
  %v927 = vmul.f32 %v859, %v917
  %v928 = vmul.f32 %v900, %v918
  %v929 = vmul.f32 %v902, %v919
  %v930 = vadd.f32 %v922, %v923
  %v931 = vadd.f32 %v930, %v924
  %v932 = vadd.f32 %v931, %v925
  %933 = vadd.xlane.f32.xlu0 %v932
  %v934 = vpop.xlane.xlu0 %933
  %v935 = vadd.f32 %v926, %v927
  %v936 = vadd.f32 %v935, %v928
  %v937 = vadd.f32 %v936, %v929
  %938 = vadd.xlane.f32.xlu0 %v937
  %v939 = vpop.xlane.xlu0 %938
  %v940 = vmul.f32 %v934, 0.0034722222
  %v941 = vmul.f32 %v939, 0.0034722222
  %v942 = vsub.f32 %v853, %v940
  %v943 = vsub.f32 %v855, %v940
  %v944 = vsub.f32 %v896, %v940
  %v945 = vsub.f32 %v898, %v940
  %v946 = vsub.f32 %v857, %v941
  %v947 = vsub.f32 %v859, %v941
  %v948 = vsub.f32 %v900, %v941
  %v949 = vsub.f32 %v902, %v941
  %v950 = vmul.f32 %v942, %v916
  %v951 = vmul.f32 %v943, %v917
  %v952 = vmul.f32 %v944, %v918
  %v953 = vmul.f32 %v945, %v919
  %v954 = vmul.f32 %v946, %v916
  %v955 = vmul.f32 %v947, %v917
  %v956 = vmul.f32 %v948, %v918
  %v957 = vmul.f32 %v949, %v919
  %v958 = vmul.f32 %v950, %v950
  %v959 = vmul.f32 %v951, %v951
  %v960 = vmul.f32 %v952, %v952
  %v961 = vmul.f32 %v953, %v953
  %v962 = vmul.f32 %v954, %v954
  %v963 = vmul.f32 %v955, %v955
  %v964 = vmul.f32 %v956, %v956
  %v965 = vmul.f32 %v957, %v957
  %v966 = vadd.f32 %v958, %v959
  %v967 = vadd.f32 %v966, %v960
  %v968 = vadd.f32 %v967, %v961
  %969 = vadd.xlane.f32.xlu0 %v968
  %v970 = vpop.xlane.xlu0 %969
  %v971 = vadd.f32 %v962, %v963
  %v972 = vadd.f32 %v971, %v964
  %v973 = vadd.f32 %v972, %v965
  %974 = vadd.xlane.f32.xlu0 %v973
  %v975 = vpop.xlane.xlu0 %974
  %v976 = vmul.f32 %v970, 0.0034722222
  %v977 = vmul.f32 %v975, 0.0034722222
  %v978 = vadd.f32 %v976, 1e-05
  %v979 = vadd.f32 %v977, 1e-05
  %v980 = vrsqrt.pop %v978
  %v981 = vrsqrt.pop %v979
  %v982 = vmul.f32 %v920, %v980
  %v983 = vmul.f32 %v921, %v981
  %v984 = vmul.f32 %v940, %v982
  %v985 = vmul.f32 %v941, %v983
  %988 = vrot.lane.b32.xlu0 %v984, 1
  %v989 = vpop.permute.xlu0 %988
  %990 = vrot.lane.b32.xlu0 %v985, 1
  %v991 = vpop.permute.xlu0 %990
  %v994 = vsub.f32 %v920, %v989
  %v995 = vsub.f32 %v921, %v991
  %997 = vset.pattern.permute.xlu0 4
  %998 = vperm.xlu0 %997, %v982
  %v999 = vpop.permute.xlu0 %998
  %1002 = vset.pattern.permute.xlu0 4
  %1003 = vperm.xlu0 %1002, %v983
  %v1004 = vpop.permute.xlu0 %1003
  %v1006 = vmul.f32 %v853, %v999
  %v1007 = vmul.f32 %v855, %v999
  %v1008 = vmul.f32 %v896, %v999
  %v1009 = vmul.f32 %v898, %v999
  %v1010 = vmul.f32 %v857, %v1004
  %v1011 = vmul.f32 %v859, %v1004
  %v1012 = vmul.f32 %v900, %v1004
  %v1013 = vmul.f32 %v902, %v1004
  %1015 = vset.pattern.permute.xlu0 5
  %1016 = vperm.xlu0 %1015, %v994
  %v1017 = vpop.permute.xlu0 %1016
  %1020 = vset.pattern.permute.xlu0 5
  %1021 = vperm.xlu0 %1020, %v995
  %v1022 = vpop.permute.xlu0 %1021
  %v1024 = vadd.f32 %v1006, %v1017
  %v1025 = vadd.f32 %v1007, %v1017
  %v1026 = vadd.f32 %v1008, %v1017
  %v1027 = vadd.f32 %v1009, %v1017
  %v1028 = vadd.f32 %v1010, %v1022
  %v1029 = vadd.f32 %v1011, %v1022
  %v1030 = vadd.f32 %v1012, %v1022
  %v1031 = vadd.f32 %v1013, %v1022
  %v1032 = vmax.f32 %v1024, 0.0
  %v1033 = vmax.f32 %v1025, 0.0
  %v1034 = vmax.f32 %v1026, 0.0
  %v1035 = vmax.f32 %v1027, 0.0
  %v1036 = vmax.f32 %v1028, 0.0
  %v1037 = vmax.f32 %v1029, 0.0
  %v1038 = vmax.f32 %v1030, 0.0
  %v1039 = vmax.f32 %v1031, 0.0
  %1040 = vst [vmem:[%s4] sm:$0xff] %v1032
  %1041 = vst [vmem:[%s4 + $0x8] sm:$0xff] %v1033
  %1042 = vst [vmem:[%s4 + $0x10] sm:$0xff] %v1034
  %1043 = vst [vmem:[%s4 + $0x18] sm:$0xff] %v1035
  %1044 = vst [vmem:[%s4 + $0x20] sm:$0xff] %v1036
  %1045 = vst [vmem:[%s4 + $0x28] sm:$0xff] %v1037
  %1046 = vst [vmem:[%s4 + $0x30] sm:$0xff] %v1038
  %1047 = vst [vmem:[%s4 + $0x38] sm:$0xff] %v1039
  // Predicated region
  $region18: #{encoder_forward.1} parent=0 // pred_check
    _
  $region19: #{encoder_forward.1} parent=0 // pred_check_branch
    %1049 = sbr.rel (0) target = $region21
  $region20: #{encoder_forward.1} parent=0 // pred_region
    _
  $region21: #{encoder_forward.1} parent=0 // pred_fallthru
    _
  // Predicated region
  $region22: #{encoder_forward.1} parent=0 // pred_check
    _
  $region23: #{encoder_forward.1} parent=0 // pred_check_branch
    %1051 = sbr.rel (0) target = $region25
  $region24: #{encoder_forward.1} parent=0 // pred_region
    _
  $region25: #{encoder_forward.1} parent=0 // pred_fallthru
    _

</llo_original>
